<compile_context>
chip_gen: v7x
topology: tpu7x:2x2x1
jax: 0.10.0
libtpu: 0.0.40
codegen_flags: <defaults>
</compile_context>

<pallas_src>
import jax
import jax.numpy as jnp
from jax.experimental import pallas as pl
from jax.experimental.pallas import tpu as pltpu

IN_FEATURES = 337
HIDDEN = 100
HIDDEN_PAD = 128          # lane-padded hidden width
OUT_FEATURES = 1
DEFAULT_TM = 2048         # batch tile (rows of x per grid step)


def _round_up(x, m):
    return ((x + m - 1) // m) * m


def _mlp_kernel(x_ref, w1_ref, b1_ref, w2_ref, b2_ref, o_ref):
    # fc1: (TM, 337) @ (337, 128) + (1, 128)   -> MXU, f32 accumulation
    h = jnp.dot(x_ref[...], w1_ref[...], preferred_element_type=jnp.float32)
    h = jnp.maximum(h + b1_ref[...], 0.0)                       # ReLU
    # fc2: (TM, 128) @ (128, 1) + (1, 1)
    y = jnp.dot(h, w2_ref[...], preferred_element_type=jnp.float32)
    y = y + b2_ref[...]
    # Sigmoid: 1 / (1 + exp(-y)); reciprocal via pl.reciprocal.
    o_ref[...] = pl.reciprocal(1.0 + jnp.exp(-y), approx=False).astype(o_ref.dtype)


def nonseq_v2_forward(x, w1, b1, w2, b2, *, tm=DEFAULT_TM):
    """x: (B, 337) f32; w1: (337, 100); b1: (100,); w2: (100, 1); b2: (1,)."""
    B = x.shape[0]

    # --- lane-pad hidden dim 100 -> 128 (zeros => mathematically identical) ---
    w1p = jnp.pad(w1, ((0, 0), (0, HIDDEN_PAD - HIDDEN)))
    b1p = jnp.pad(b1, (0, HIDDEN_PAD - HIDDEN)).reshape(1, HIDDEN_PAD)
    w2p = jnp.pad(w2, ((0, HIDDEN_PAD - HIDDEN), (0, 0)))
    b2p = b2.reshape(1, OUT_FEATURES)

    # --- batch tiling: TM multiple of 8, pad B up to a multiple of TM ---
    tm_eff = min(tm, _round_up(B, 8))
    b_pad = _round_up(B, tm_eff)
    if b_pad != B:
        x = jnp.pad(x, ((0, b_pad - B), (0, 0)))
    grid = (b_pad // tm_eff,)

    out = pl.pallas_call(
        _mlp_kernel,
        out_shape=jax.ShapeDtypeStruct((b_pad, OUT_FEATURES), jnp.float32),
        grid=grid,
        in_specs=[
            # streamed: one batch tile of x per grid step
            pl.BlockSpec((tm_eff, IN_FEATURES), lambda i: (i, 0)),
            # resident: same block every step -> DMA'd once
            pl.BlockSpec((IN_FEATURES, HIDDEN_PAD), lambda i: (0, 0)),
            pl.BlockSpec((1, HIDDEN_PAD), lambda i: (0, 0)),
            pl.BlockSpec((HIDDEN_PAD, OUT_FEATURES), lambda i: (0, 0)),
            pl.BlockSpec((1, OUT_FEATURES), lambda i: (0, 0)),
        ],
        out_specs=pl.BlockSpec((tm_eff, OUT_FEATURES), lambda i: (i, 0)),
        compiler_params=pltpu.CompilerParams(
            dimension_semantics=("parallel",),  # megacore sharding on v7x
        ),
    )(x, w1p, b1p, w2p, b2p)

    return out[:B]


def init_params(key):
    """Deterministic init mimicking torch.nn.Linear defaults
    (uniform in [-1/sqrt(fan_in), 1/sqrt(fan_in)])."""
    k1, k2, k3, k4 = jax.random.split(key, 4)
    bound1 = 1.0 / (IN_FEATURES ** 0.5)
    bound2 = 1.0 / (HIDDEN ** 0.5)
    # stored as (in, out) = W^T relative to PyTorch's (out, in)
    w1 = jax.random.uniform(k1, (IN_FEATURES, HIDDEN), jnp.float32,
                            minval=-bound1, maxval=bound1)
    b1 = jax.random.uniform(k2, (HIDDEN,), jnp.float32,
                            minval=-bound1, maxval=bound1)
    w2 = jax.random.uniform(k3, (HIDDEN, OUT_FEATURES), jnp.float32,
                            minval=-bound2, maxval=bound2)
    b2 = jax.random.uniform(k4, (OUT_FEATURES,), jnp.float32,
                            minval=-bound2, maxval=bound2)
    return w1, b1, w2, b2


if __name__ == "__main__":
    key = jax.random.PRNGKey(0)
    k_x, k_p = jax.random.split(key)

    # Small demo shapes; tm=128 so the batch grid (and tail padding) is
    # exercised: B=500 -> padded to 512, grid=(4,).
    B = 500
    x = jax.random.normal(k_x, (B, IN_FEATURES), jnp.float32)
    w1, b1, w2, b2 = init_params(k_p)

    out = nonseq_v2_forward(x, w1, b1, w2, b2, tm=128)
    out = jax.block_until_ready(out)

    # Reference check in plain JAX (same math as the PyTorch module).
    ref = 1.0 / (1.0 + jnp.exp(-(jnp.maximum(x @ w1 + b1, 0.0) @ w2 + b2)))
    assert out.shape == (B, OUT_FEATURES)
    assert jnp.allclose(out, ref, atol=1e-5, rtol=1e-5)

    print("KERNEL_OK")
</pallas_src>

<mosaic_0001>
module attributes {stable_mosaic.version = 11 : i64} {
  func.func @_mlp_kernel(%arg0: i32, %arg1: memref<128x337xf32, #tpu.memory_space<vmem>>, %arg2: memref<337x128xf32, #tpu.memory_space<vmem>>, %arg3: memref<1x128xf32, #tpu.memory_space<vmem>>, %arg4: memref<128x1xf32, #tpu.memory_space<vmem>>, %arg5: memref<1x1xf32, #tpu.memory_space<vmem>>, %arg6: memref<128x1xf32, #tpu.memory_space<vmem>>) attributes {dimension_semantics = [#tpu.dimension_semantics<parallel>], iteration_bounds = array<i64: 4>, scalar_prefetch = 0 : i64, scratch_operands = 0 : i64, tpu.core_type = #tpu.core_type<tc>, window_params = [{transform_indices = @transform_0, window_bounds = array<i64: 128, 337>}, {pipeline_mode = #tpu.pipeline_mode<synchronous>, transform_indices = @transform_1, window_bounds = array<i64: 337, 128>}, {pipeline_mode = #tpu.pipeline_mode<synchronous>, transform_indices = @transform_2, window_bounds = array<i64: 1, 128>}, {pipeline_mode = #tpu.pipeline_mode<synchronous>, transform_indices = @transform_3, window_bounds = array<i64: 128, 1>}, {pipeline_mode = #tpu.pipeline_mode<synchronous>, transform_indices = @transform_4, window_bounds = array<i64: 1, 1>}, {transform_indices = @transform_5, window_bounds = array<i64: 128, 1>}]} {
    %c0 = arith.constant 0 : index
    %c0_0 = arith.constant 0 : index
    %0 = vector.load %arg1[%c0, %c0_0] : memref<128x337xf32, #tpu.memory_space<vmem>>, vector<128x337xf32>
    %c0_1 = arith.constant 0 : index
    %c0_2 = arith.constant 0 : index
    %1 = vector.load %arg2[%c0_1, %c0_2] : memref<337x128xf32, #tpu.memory_space<vmem>>, vector<337x128xf32>
    %cst = arith.constant dense<0.000000e+00> : vector<128x128xf32>
    %2 = tpu.matmul %0, %1, %cst {dimension_numbers = #tpu.dot_dimension_numbers<[1], [0], [0], [1], [0, 0, 1, 1], [], []>} : vector<128x337xf32>, vector<337x128xf32>, vector<128x128xf32> -> vector<128x128xf32>
    %c0_3 = arith.constant 0 : index
    %c0_4 = arith.constant 0 : index
    %3 = vector.load %arg3[%c0_3, %c0_4] : memref<1x128xf32, #tpu.memory_space<vmem>>, vector<1x128xf32>
    %4 = vector.broadcast %3 : vector<1x128xf32> to vector<128x128xf32>
    %5 = arith.addf %2, %4 : vector<128x128xf32>
    %cst_5 = arith.constant 0.000000e+00 : f32
    %6 = vector.broadcast %cst_5 : f32 to vector<128x128xf32>
    %7 = arith.maximumf %5, %6 : vector<128x128xf32>
    %c0_6 = arith.constant 0 : index
    %c0_7 = arith.constant 0 : index
    %8 = vector.load %arg4[%c0_6, %c0_7] : memref<128x1xf32, #tpu.memory_space<vmem>>, vector<128x1xf32>
    %cst_8 = arith.constant dense<0.000000e+00> : vector<128x1xf32>
    %9 = tpu.matmul %7, %8, %cst_8 {dimension_numbers = #tpu.dot_dimension_numbers<[1], [0], [0], [1], [0, 0, 1, 1], [], []>} : vector<128x128xf32>, vector<128x1xf32>, vector<128x1xf32> -> vector<128x1xf32>
    %c0_9 = arith.constant 0 : index
    %c0_10 = arith.constant 0 : index
    %10 = vector.load %arg5[%c0_9, %c0_10] : memref<1x1xf32, #tpu.memory_space<vmem>>, vector<1x1xf32>
    %11 = vector.broadcast %10 : vector<1x1xf32> to vector<128x1xf32>
    %12 = arith.addf %9, %11 : vector<128x1xf32>
    %cst_11 = arith.constant 0.000000e+00 : f32
    %13 = vector.broadcast %cst_11 : f32 to vector<128x1xf32>
    %14 = arith.subf %13, %12 : vector<128x1xf32>
    %15 = math.exp %14 : vector<128x1xf32>
    %cst_12 = arith.constant 1.000000e+00 : f32
    %16 = vector.broadcast %cst_12 : f32 to vector<128x1xf32>
    %17 = arith.addf %16, %15 : vector<128x1xf32>
    %18 = tpu.reciprocal %17 : vector<128x1xf32> -> vector<128x1xf32>
    %c0_13 = arith.constant 0 : index
    %c0_14 = arith.constant 0 : index
    %19 = vector.load %arg6[%c0_13, %c0_14] : memref<128x1xf32, #tpu.memory_space<vmem>>, vector<128x1xf32>
    tpu.vector_store %arg6[%c0_13, %c0_14], %18 {strides = array<i32>} : memref<128x1xf32, #tpu.memory_space<vmem>>, vector<128x1xf32>,
    return
  }
  func.func @transform_0(%arg0: i32) -> (i32, i32) {
    %c0_i32 = arith.constant 0 : i32
    %c0_i32_0 = arith.constant 0 : i32
    return %arg0, %c0_i32 : i32, i32
  }
  func.func @transform_1(%arg0: i32) -> (i32, i32) {
    %c0_i32 = arith.constant 0 : i32
    %c0_i32_0 = arith.constant 0 : i32
    %c0_i32_1 = arith.constant 0 : i32
    return %c0_i32, %c0_i32_0 : i32, i32
  }
  func.func @transform_2(%arg0: i32) -> (i32, i32) {
    %c0_i32 = arith.constant 0 : i32
    %c0_i32_0 = arith.constant 0 : i32
    %c0_i32_1 = arith.constant 0 : i32
    return %c0_i32, %c0_i32_0 : i32, i32
  }
  func.func @transform_3(%arg0: i32) -> (i32, i32) {
    %c0_i32 = arith.constant 0 : i32
    %c0_i32_0 = arith.constant 0 : i32
    %c0_i32_1 = arith.constant 0 : i32
    return %c0_i32, %c0_i32_0 : i32, i32
  }
  func.func @transform_4(%arg0: i32) -> (i32, i32) {
    %c0_i32 = arith.constant 0 : i32
    %c0_i32_0 = arith.constant 0 : i32
    %c0_i32_1 = arith.constant 0 : i32
    return %c0_i32, %c0_i32_0 : i32, i32
  }
  func.func @transform_5(%arg0: i32) -> (i32, i32) {
    %c0_i32 = arith.constant 0 : i32
    %c0_i32_0 = arith.constant 0 : i32
    return %arg0, %c0_i32 : i32, i32
  }
}

</mosaic_0001>

<llo_original>
// kernel: tpu_custom_call.1
$region0: #{tpu_custom_call.1}
  #allocation0 [shape = 'u32[]', space=smem, size = 0x4, offset = 0x4, fixed_abs, tag = 'smem constant byte address 0x4 - core index']
  #allocation1 [shape = 'u32[144,128]{1,0:T(1,128)}', space=vmem, size = 0x12000, scoped, tag = 'internal scratch']
  #allocation2 [shape = 'f32[1,1]{1,0:T(1,128)S(1)}', space=vmem, size = 0x200, scoped, tag = 'scoped memory for tpu_custom_call.1']
  %s0 = inlined_call_operand.vmem [shape: f32[512,337], index: 0, kind: input, shape index: {}]
  %s1 = inlined_call_operand.vmem [shape: f32[337,128], index: 1, kind: input, shape index: {}]
  %s2 = inlined_call_operand.vmem [shape: f32[1,128], index: 2, kind: input, shape index: {}]
  %s3 = inlined_call_operand.vmem [shape: f32[128,1], index: 3, kind: input, shape index: {}]
  %s4 = inlined_call_operand.<no memory space> [shape: f32[1,1], index: 4, kind: input, shape index: {}]
  %s5 = inlined_call_operand.vmem [shape: f32[512,1], index: 5, kind: output, shape index: {}]
  %s6 = sld [smem:[#allocation0]]
  $region53: #{tpu_custom_call.1} parent=0
    _
  %s8 = ssub.s32 1, %s6
  %s9 = scalar_select 0, %s8, %s6
  %v10 = vstv %s4
  %11 = vst [vmem:[#allocation2] sm:$0x1] %v10
  loop: start=0, step=1, limit=6
  $region2: #{tpu_custom_call.1} parent=0 // loop_pre_header
    _
  $region3: #{tpu_custom_call.1} parent=0 // loop_header
    %s13 = sphi 0, %s17
    %p14 = scmp.ge.s32.totalorder %s13, 6
    %s23 = sphi 0, %s25
    %s26 = sphi 0, %s23
    %s27 = sphi 0, %s26
    %s43 = sphi 0, %s27
    %s47 = sphi 0, %s47
    %s49 = sphi 0, %s47
    %s50 = sphi 0, %s49
    %s64 = sphi 0, %s50
    %s68 = sphi 0, %s68
    %s70 = sphi 0, %s68
    %s71 = sphi 0, %s70
    %s85 = sphi 0, %s71
    %s89 = sphi 0, %s89
    %s91 = sphi 0, %s89
    %s92 = sphi 0, %s91
    %s106 = sphi 0, %s92
    %s110 = sphi 0, %s110
    %s112 = sphi 0, %s110
    %s113 = sphi 0, %s112
    %s127 = sphi 0, %s113
    %s133 = sphi 0, %s135
    %s136 = sphi 0, %s133
    %s137 = sphi 0, %s136
    %s153 = sphi 0, %s137
  $region4: #{tpu_custom_call.1} parent=0 // loop_header_branch
    %16 = sbr.rel (%p14) target = $region8
  $region5: #{tpu_custom_call.1} parent=0 // loop_body
    %s18 = ssub.s32 %s13, 1
    %s19 = ssub.s32 %s13, 2
    %s20 = sadd.s32 %s13, 1
    %s21 = ssub.s32 %s13, %s20
    %p22 = scmp.eq.s32.totalorder %s21, 0
    %s24 = sadd.s32 %s23, 1
    %s25 = scalar_select %p22, %s23, %s24
    %p28 = pneg %p22
    %p29 = scmp.eq.s32.totalorder %s13, 3
    %p30 = por %p28, %p29
    %p31 = scmp.ne.s32.totalorder %s23, %s26
    %p32 = scmp.eq.s32.totalorder %s13, 0
    %p33 = por %p31, %p32
    %p34 = scmp.ne.s32.totalorder %s23, %s26
    %p35 = scmp.eq.s32.totalorder %s18, 3
    %p36 = por %p34, %p35
    %p37 = scmp.ne.s32.totalorder %s26, %s27
    %p38 = scmp.eq.s32.totalorder %s18, 0
    %p39 = por %p37, %p38
    %p40 = scmp.ne.s32.totalorder %s26, %s27
    %p41 = scmp.eq.s32.totalorder %s19, 3
    %p42 = por %p40, %p41
    %p44 = scmp.ne.s32.totalorder %s27, %s43
    %p45 = scmp.eq.s32.totalorder %s19, 0
    %p46 = por %p44, %p45
    %s48 = sadd.s32 %s47, 1
    %p51 = scmp.eq.s32.totalorder %s13, 3
    %p52 = scmp.ne.s32.totalorder %s47, %s49
    %p53 = scmp.eq.s32.totalorder %s13, 0
    %p54 = por %p52, %p53
    %p55 = scmp.ne.s32.totalorder %s47, %s49
    %p56 = scmp.eq.s32.totalorder %s18, 3
    %p57 = por %p55, %p56
    %p58 = scmp.ne.s32.totalorder %s49, %s50
    %p59 = scmp.eq.s32.totalorder %s18, 0
    %p60 = por %p58, %p59
    %p61 = scmp.ne.s32.totalorder %s49, %s50
    %p62 = scmp.eq.s32.totalorder %s19, 3
    %p63 = por %p61, %p62
    %p65 = scmp.ne.s32.totalorder %s50, %s64
    %p66 = scmp.eq.s32.totalorder %s19, 0
    %p67 = por %p65, %p66
    %s69 = sadd.s32 %s68, 1
    %p72 = scmp.eq.s32.totalorder %s13, 3
    %p73 = scmp.ne.s32.totalorder %s68, %s70
    %p74 = scmp.eq.s32.totalorder %s13, 0
    %p75 = por %p73, %p74
    %p76 = scmp.ne.s32.totalorder %s68, %s70
    %p77 = scmp.eq.s32.totalorder %s18, 3
    %p78 = por %p76, %p77
    %p79 = scmp.ne.s32.totalorder %s70, %s71
    %p80 = scmp.eq.s32.totalorder %s18, 0
    %p81 = por %p79, %p80
    %p82 = scmp.ne.s32.totalorder %s70, %s71
    %p83 = scmp.eq.s32.totalorder %s19, 3
    %p84 = por %p82, %p83
    %p86 = scmp.ne.s32.totalorder %s71, %s85
    %p87 = scmp.eq.s32.totalorder %s19, 0
    %p88 = por %p86, %p87
    %s90 = sadd.s32 %s89, 1
    %p93 = scmp.eq.s32.totalorder %s13, 3
    %p94 = scmp.ne.s32.totalorder %s89, %s91
    %p95 = scmp.eq.s32.totalorder %s13, 0
    %p96 = por %p94, %p95
    %p97 = scmp.ne.s32.totalorder %s89, %s91
    %p98 = scmp.eq.s32.totalorder %s18, 3
    %p99 = por %p97, %p98
    %p100 = scmp.ne.s32.totalorder %s91, %s92
    %p101 = scmp.eq.s32.totalorder %s18, 0
    %p102 = por %p100, %p101
    %p103 = scmp.ne.s32.totalorder %s91, %s92
    %p104 = scmp.eq.s32.totalorder %s19, 3
    %p105 = por %p103, %p104
    %p107 = scmp.ne.s32.totalorder %s92, %s106
    %p108 = scmp.eq.s32.totalorder %s19, 0
    %p109 = por %p107, %p108
    %s111 = sadd.s32 %s110, 1
    %p114 = scmp.eq.s32.totalorder %s13, 3
    %p115 = scmp.ne.s32.totalorder %s110, %s112
    %p116 = scmp.eq.s32.totalorder %s13, 0
    %p117 = por %p115, %p116
    %p118 = scmp.ne.s32.totalorder %s110, %s112
    %p119 = scmp.eq.s32.totalorder %s18, 3
    %p120 = por %p118, %p119
    %p121 = scmp.ne.s32.totalorder %s112, %s113
    %p122 = scmp.eq.s32.totalorder %s18, 0
    %p123 = por %p121, %p122
    %p124 = scmp.ne.s32.totalorder %s112, %s113
    %p125 = scmp.eq.s32.totalorder %s19, 3
    %p126 = por %p124, %p125
    %p128 = scmp.ne.s32.totalorder %s113, %s127
    %p129 = scmp.eq.s32.totalorder %s19, 0
    %p130 = por %p128, %p129
    %s131 = ssub.s32 %s13, %s20
    %p132 = scmp.eq.s32.totalorder %s131, 0
    %s134 = sadd.s32 %s133, 1
    %s135 = scalar_select %p132, %s133, %s134
    %p138 = pneg %p132
    %p139 = scmp.eq.s32.totalorder %s13, 3
    %p140 = por %p138, %p139
    %p141 = scmp.ne.s32.totalorder %s133, %s136
    %p142 = scmp.eq.s32.totalorder %s13, 0
    %p143 = por %p141, %p142
    %p144 = scmp.ne.s32.totalorder %s133, %s136
    %p145 = scmp.eq.s32.totalorder %s18, 3
    %p146 = por %p144, %p145
    %p147 = scmp.ne.s32.totalorder %s136, %s137
    %p148 = scmp.eq.s32.totalorder %s18, 0
    %p149 = por %p147, %p148
    %p150 = scmp.ne.s32.totalorder %s136, %s137
    %p151 = scmp.eq.s32.totalorder %s19, 3
    %p152 = por %p150, %p151
    %p154 = scmp.ne.s32.totalorder %s137, %s153
    %p155 = scmp.eq.s32.totalorder %s19, 0
    %p156 = por %p154, %p155
    %p157 = scmp.le.s32.totalorder 1, %s13
    %p158 = scmp.lt.s32.totalorder %s13, 5
    %p159 = pnand %p157, %p158
    %p160 = pneg %p159
    // Predicated region
    $region9: #{tpu_custom_call.1} parent=5 // pred_check
      _
    $region10: #{tpu_custom_call.1} parent=5 // pred_check_branch
      %162 = sbr.rel (%p159) target = $region12
    $region11: #{tpu_custom_call.1} parent=5 // pred_region
      %s163 = ssub.s32 %s13, 1
      // Predicated region
      $region13: #{tpu_custom_call.1} parent=11 // pred_check
        %p164 = pneg %p60
      $region14: #{tpu_custom_call.1} parent=11 // pred_check_branch
        %166 = sbr.rel (%p164) target = $region16
      $region15: #{tpu_custom_call.1} parent=11 // pred_region
        _
      $region16: #{tpu_custom_call.1} parent=11 // pred_fallthru
        _
      // Predicated region
      $region17: #{tpu_custom_call.1} parent=11 // pred_check
        %p167 = pneg %p81
      $region18: #{tpu_custom_call.1} parent=11 // pred_check_branch
        %169 = sbr.rel (%p167) target = $region20
      $region19: #{tpu_custom_call.1} parent=11 // pred_region
        _
      $region20: #{tpu_custom_call.1} parent=11 // pred_fallthru
        _
      // Predicated region
      $region21: #{tpu_custom_call.1} parent=11 // pred_check
        %p170 = pneg %p102
      $region22: #{tpu_custom_call.1} parent=11 // pred_check_branch
        %172 = sbr.rel (%p170) target = $region24
      $region23: #{tpu_custom_call.1} parent=11 // pred_region
        _
      $region24: #{tpu_custom_call.1} parent=11 // pred_fallthru
        _
      // Predicated region
      $region25: #{tpu_custom_call.1} parent=11 // pred_check
        %p173 = pneg %p123
      $region26: #{tpu_custom_call.1} parent=11 // pred_check_branch
        %175 = sbr.rel (%p173) target = $region28
      $region27: #{tpu_custom_call.1} parent=11 // pred_region
        _
      $region28: #{tpu_custom_call.1} parent=11 // pred_fallthru
        _
    $region12: #{tpu_custom_call.1} parent=5 // pred_fallthru
      _
    %p176 = scmp.lt.s32.totalorder %s13, 4
    // Predicated region
    $region29: #{tpu_custom_call.1} parent=5 // pred_check
      %p177 = pneg %p176
    $region30: #{tpu_custom_call.1} parent=5 // pred_check_branch
      %179 = sbr.rel (%p177) target = $region32
    $region31: #{tpu_custom_call.1} parent=5 // pred_region
      // Predicated region
      $region33: #{tpu_custom_call.1} parent=31 // pred_check
        %p180 = pneg %p33
      $region34: #{tpu_custom_call.1} parent=31 // pred_check_branch
        %182 = sbr.rel (%p180) target = $region36
      $region35: #{tpu_custom_call.1} parent=31 // pred_region
        %s183 = smul.u32 16, %s13
        %p184 = scmp.lt.s32.totalorder %s183, 63
        %s185 = scalar_select %p184, %s183, 63
        %s186 = smul.addr %s185, 3
        %s187 = smul.addr %s186, 8
        %s188 = scalar_lea.vmem %s0, %s187
        %s189 = smul.u32 16, %s13
      $region36: #{tpu_custom_call.1} parent=31 // pred_fallthru
        _
    $region32: #{tpu_custom_call.1} parent=5 // pred_fallthru
      _
    %p190 = scmp.le.s32.totalorder 1, %s13
    %p191 = scmp.lt.s32.totalorder %s13, 5
    %p192 = pnand %p190, %p191
    %p193 = pneg %p192
    // Predicated region
    $region37: #{tpu_custom_call.1} parent=5 // pred_check
      _
    $region38: #{tpu_custom_call.1} parent=5 // pred_check_branch
      %195 = sbr.rel (%p192) target = $region40
    $region39: #{tpu_custom_call.1} parent=5 // pred_region
      %s196 = ssub.s32 %s13, 1
      %s197 = smul.u32 16, %s18
      %p198 = scmp.lt.s32.totalorder %s197, 63
      %s199 = scalar_select %p198, %s197, 63
      %s200 = smul.addr %s199, 3
      %s201 = smul.addr %s200, 8
      %s202 = scalar_lea.vmem %s0, %s201
      %p203 = pneg %p39
      %p204 = pneg %p36
      %p205 = pneg %p60
      %p206 = pneg %p57
      %p207 = pneg %p81
      %p208 = pneg %p78
      %p209 = pneg %p102
      %p210 = pneg %p99
      %p211 = pneg %p123
      %p212 = pneg %p120
      %p213 = pneg %p149
      %p214 = pneg %p146
      %s215 = smul.u32 16, %s18
      %p216 = scmp.lt.s32.totalorder %s215, 63
      %s217 = scalar_select %p216, %s215, 63
      %s218 = smul.addr %s217, 8
      %s219 = scalar_lea.vmem %s5, %s218
      %s220 = smul.u32 16, %s18
      %p221 = scmp.lt.s32.totalorder %s220, 63
      %s222 = scalar_select %p221, %s220, 63
      %s223 = smul.addr %s222, 3
      %s224 = smul.addr %s223, 8
      %s225 = scalar_lea.vmem %s0, %s224
      %s226 = smul.u32 16, %s18
      %s227 = smul.u32 16, %s18
      %p228 = scmp.lt.s32.totalorder %s227, 63
      %s229 = scalar_select %p228, %s227, 63
      %s230 = smul.addr %s229, 8
      %s231 = scalar_lea.vmem %s5, %s230
      %s232 = smul.u32 16, %s18
      %v233 = vld [vmem:[%s225] sm:$0xff]
      %v234 = vld [vmem:[%s225 + $0x8] sm:$0xff]
      %v235 = vld [vmem:[%s225 + $0x10] sm:$0xff]
      %v236 = vld [vmem:[%s225 + $0x18] sm:$0xff]
      %v237 = vld [vmem:[%s225 + $0x20] sm:$0xff]
      %v238 = vld [vmem:[%s225 + $0x28] sm:$0xff]
      %v239 = vld [vmem:[%s225 + $0x30] sm:$0xff]
      %v240 = vld [vmem:[%s225 + $0x38] sm:$0xff]
      %v241 = vld [vmem:[%s225 + $0x40] sm:$0xff]
      %v242 = vld [vmem:[%s225 + $0x48] sm:$0xff]
      %v243 = vld [vmem:[%s225 + $0x50] sm:$0xff]
      %v244 = vld [vmem:[%s225 + $0x58] sm:$0xff]
      %v245 = vld [vmem:[%s225 + $0x60] sm:$0xff]
      %v246 = vld [vmem:[%s225 + $0x68] sm:$0xff]
      %v247 = vld [vmem:[%s225 + $0x70] sm:$0xff]
      %v248 = vld [vmem:[%s225 + $0x78] sm:$0xff]
      %v249 = vld [vmem:[%s225 + $0x80] sm:$0xff]
      %v250 = vld [vmem:[%s225 + $0x88] sm:$0xff]
      %v251 = vld [vmem:[%s225 + $0x90] sm:$0xff]
      %v252 = vld [vmem:[%s225 + $0x98] sm:$0xff]
      %v253 = vld [vmem:[%s225 + $0xa0] sm:$0xff]
      %v254 = vld [vmem:[%s225 + $0xa8] sm:$0xff]
      %v255 = vld [vmem:[%s225 + $0xb0] sm:$0xff]
      %v256 = vld [vmem:[%s225 + $0xb8] sm:$0xff]
      %v257 = vld [vmem:[%s225 + $0xc0] sm:$0xff]
      %v258 = vld [vmem:[%s225 + $0xc8] sm:$0xff]
      %v259 = vld [vmem:[%s225 + $0xd0] sm:$0xff]
      %v260 = vld [vmem:[%s225 + $0xd8] sm:$0xff]
      %v261 = vld [vmem:[%s225 + $0xe0] sm:$0xff]
      %v262 = vld [vmem:[%s225 + $0xe8] sm:$0xff]
      %v263 = vld [vmem:[%s225 + $0xf0] sm:$0xff]
      %v264 = vld [vmem:[%s225 + $0xf8] sm:$0xff]
      %v265 = vld [vmem:[%s225 + $0x100] sm:$0xff]
      %v266 = vld [vmem:[%s225 + $0x108] sm:$0xff]
      %v267 = vld [vmem:[%s225 + $0x110] sm:$0xff]
      %v268 = vld [vmem:[%s225 + $0x118] sm:$0xff]
      %v269 = vld [vmem:[%s225 + $0x120] sm:$0xff]
      %v270 = vld [vmem:[%s225 + $0x128] sm:$0xff]
      %v271 = vld [vmem:[%s225 + $0x130] sm:$0xff]
      %v272 = vld [vmem:[%s225 + $0x138] sm:$0xff]
      %v273 = vld [vmem:[%s225 + $0x140] sm:$0xff]
      %v274 = vld [vmem:[%s225 + $0x148] sm:$0xff]
      %v275 = vld [vmem:[%s225 + $0x150] sm:$0xff]
      %v276 = vld [vmem:[%s225 + $0x158] sm:$0xff]
      %v277 = vld [vmem:[%s225 + $0x160] sm:$0xff]
      %v278 = vld [vmem:[%s225 + $0x168] sm:$0xff]
      %v279 = vld [vmem:[%s225 + $0x170] sm:$0xff]
      %v280 = vld [vmem:[%s225 + $0x178] sm:$0xff]
      %v281 = vld [vmem:[%s1] sm:$0xff]
      %v282 = vld [vmem:[%s1 + $0x8] sm:$0xff]
      %v283 = vld [vmem:[%s1 + $0x10] sm:$0xff]
      %v284 = vld [vmem:[%s1 + $0x18] sm:$0xff]
      %v285 = vld [vmem:[%s1 + $0x20] sm:$0xff]
      %v286 = vld [vmem:[%s1 + $0x28] sm:$0xff]
      %v287 = vld [vmem:[%s1 + $0x30] sm:$0xff]
      %v288 = vld [vmem:[%s1 + $0x38] sm:$0xff]
      %v289 = vld [vmem:[%s1 + $0x40] sm:$0xff]
      %v290 = vld [vmem:[%s1 + $0x48] sm:$0xff]
      %v291 = vld [vmem:[%s1 + $0x50] sm:$0xff]
      %v292 = vld [vmem:[%s1 + $0x58] sm:$0xff]
      %v293 = vld [vmem:[%s1 + $0x60] sm:$0xff]
      %v294 = vld [vmem:[%s1 + $0x68] sm:$0xff]
      %v295 = vld [vmem:[%s1 + $0x70] sm:$0xff]
      %v296 = vld [vmem:[%s1 + $0x78] sm:$0xff]
      %v297 = vld [vmem:[%s1 + $0x80] sm:$0xff]
      %v298 = vld [vmem:[%s1 + $0x88] sm:$0xff]
      %v299 = vld [vmem:[%s1 + $0x90] sm:$0xff]
      %v300 = vld [vmem:[%s1 + $0x98] sm:$0xff]
      %v301 = vld [vmem:[%s1 + $0xa0] sm:$0xff]
      %v302 = vld [vmem:[%s1 + $0xa8] sm:$0xff]
      %v303 = vld [vmem:[%s1 + $0xb0] sm:$0xff]
      %v304 = vld [vmem:[%s1 + $0xb8] sm:$0xff]
      %v305 = vld [vmem:[%s1 + $0xc0] sm:$0xff]
      %v306 = vld [vmem:[%s1 + $0xc8] sm:$0xff]
      %v307 = vld [vmem:[%s1 + $0xd0] sm:$0xff]
      %v308 = vld [vmem:[%s1 + $0xd8] sm:$0xff]
      %v309 = vld [vmem:[%s1 + $0xe0] sm:$0xff]
      %v310 = vld [vmem:[%s1 + $0xe8] sm:$0xff]
      %v311 = vld [vmem:[%s1 + $0xf0] sm:$0xff]
      %v312 = vld [vmem:[%s1 + $0xf8] sm:$0xff]
      %v313 = vld [vmem:[%s1 + $0x100] sm:$0xff]
      %v314 = vld [vmem:[%s1 + $0x108] sm:$0xff]
      %v315 = vld [vmem:[%s1 + $0x110] sm:$0xff]
      %v316 = vld [vmem:[%s1 + $0x118] sm:$0xff]
      %v317 = vld [vmem:[%s1 + $0x120] sm:$0xff]
      %v318 = vld [vmem:[%s1 + $0x128] sm:$0xff]
      %v319 = vld [vmem:[%s1 + $0x130] sm:$0xff]
      %v320 = vld [vmem:[%s1 + $0x138] sm:$0xff]
      %v321 = vld [vmem:[%s1 + $0x140] sm:$0xff]
      %v322 = vld [vmem:[%s1 + $0x148] sm:$0xff]
      %v323 = vld [vmem:[%s1 + $0x150] sm:$0x1]
      %v324 = vld [vmem:[%s2] sm:$0x1]
      %v326 = vlaneseq
      %v327 = vshrl.u32 %v326, 7
      %v328 = vsub.s32 0, %v327
      %v329 = vrot.slane %v324, %v328
      %vm331 = vcmask 662528
      %v333 = vsel %vm331, %v235, 0
      %v336 = vsel %vm331, %v238, 0
      %v339 = vsel %vm331, %v241, 0
      %v342 = vsel %vm331, %v244, 0
      %v345 = vsel %vm331, %v247, 0
      %v348 = vsel %vm331, %v250, 0
      %v351 = vsel %vm331, %v253, 0
      %v354 = vsel %vm331, %v256, 0
      %v357 = vsel %vm331, %v259, 0
      %v360 = vsel %vm331, %v262, 0
      %v363 = vsel %vm331, %v265, 0
      %v366 = vsel %vm331, %v268, 0
      %v369 = vsel %vm331, %v271, 0
      %v372 = vsel %vm331, %v274, 0
      %v375 = vsel %vm331, %v277, 0
      %v378 = vsel %vm331, %v280, 0
      %vm380 = vcmask 1040384
      %v382 = vsel %vm380, %v323, 0
      %384 = vmatprep.subr.mxu0 0.0
      %385 = vmatpush1.msra.mxu0 %v281
      %386 = vmatprep.subr.mxu0 0.0
      %387 = vmatpush1.msra.mxu0 %v282
      %388 = vmatprep.subr.mxu0 0.0
      %389 = vmatpush1.msra.mxu0 %v283
      %390 = vmatprep.subr.mxu0 0.0
      %391 = vmatpush1.msra.mxu0 %v284
      %392 = vmatprep.subr.mxu0 0.0
      %393 = vmatpush1.msra.mxu0 %v285
      %394 = vmatprep.subr.mxu0 0.0
      %395 = vmatpush1.msra.mxu0 %v286
      %396 = vmatprep.subr.mxu0 0.0
      %397 = vmatpush1.msra.mxu0 %v287
      %398 = vmatprep.subr.mxu0 0.0
      %399 = vmatpush1.msra.mxu0 %v288
      %400 = vmatprep.subr.mxu0 0.0
      %401 = vmatpush1.msra.mxu0 %v289
      %402 = vmatprep.subr.mxu0 0.0
      %403 = vmatpush1.msra.mxu0 %v290
      %404 = vmatprep.subr.mxu0 0.0
      %405 = vmatpush1.msra.mxu0 %v291
      %406 = vmatprep.subr.mxu0 0.0
      %407 = vmatpush1.msra.mxu0 %v292
      %408 = vmatprep.subr.mxu0 0.0
      %409 = vmatpush1.msra.mxu0 %v293
      %410 = vmatprep.subr.mxu0 0.0
      %411 = vmatpush1.msra.mxu0 %v294
      %412 = vmatprep.subr.mxu0 0.0
      %413 = vmatpush1.msra.mxu0 %v295
      %414 = vmatprep.subr.mxu0 0.0
      %415 = vmatpush1.msra.mxu0 %v296
      %416 = vmatprep.subr.mxu0 0.0
      %417 = vmatpush1.msra.mxu0 %v297
      %418 = vmatprep.subr.mxu0 0.0
      %419 = vmatpush1.msra.mxu0 %v298
      %420 = vmatprep.subr.mxu0 0.0
      %421 = vmatpush1.msra.mxu0 %v299
      %422 = vmatprep.subr.mxu0 0.0
      %423 = vmatpush1.msra.mxu0 %v300
      %424 = vmatprep.subr.mxu0 0.0
      %425 = vmatpush1.msra.mxu0 %v301
      %426 = vmatprep.subr.mxu0 0.0
      %427 = vmatpush1.msra.mxu0 %v302
      %428 = vmatprep.subr.mxu0 0.0
      %429 = vmatpush1.msra.mxu0 %v303
      %430 = vmatprep.subr.mxu0 0.0
      %431 = vmatpush1.msra.mxu0 %v304
      %432 = vmatprep.subr.mxu0 0.0
      %433 = vmatpush1.msra.mxu0 %v305
      %434 = vmatprep.subr.mxu0 0.0
      %435 = vmatpush1.msra.mxu0 %v306
      %436 = vmatprep.subr.mxu0 0.0
      %437 = vmatpush1.msra.mxu0 %v307
      %438 = vmatprep.subr.mxu0 0.0
      %439 = vmatpush1.msra.mxu0 %v308
      %440 = vmatprep.subr.mxu0 0.0
      %441 = vmatpush1.msra.mxu0 %v309
      %442 = vmatprep.subr.mxu0 0.0
      %443 = vmatpush1.msra.mxu0 %v310
      %444 = vmatprep.subr.mxu0 0.0
      %445 = vmatpush1.msra.mxu0 %v311
      %446 = vmatprep.subr.mxu0 0.0
      %447 = vmatpush1.msra.mxu0 %v312
      %448 = vmatprep.mubr.f32.mxu0 %v234
      %449 = vmatmul.mubr.f32.gmra.mrb[0].mxu0 %v233
      %v450 = vpop.f32.mrb[0].mxu0
      %v451 = vadd.f32 %v329, %v450
      %v452 = vpop.f32.mrb[0].mxu0
      %453 = vmatprep.mubr.f32.mxu0 %v237
      %454 = vmatmul.mubr.f32.gmra.mrb[0].mxu0 %v236
      %v455 = vpop.f32.mrb[0].mxu0
      %v456 = vadd.f32 %v329, %v455
      %v457 = vpop.f32.mrb[0].mxu0
      %458 = vmatprep.mubr.f32.mxu0 %v240
      %459 = vmatmul.mubr.f32.gmra.mrb[0].mxu0 %v239
      %v460 = vpop.f32.mrb[0].mxu0
      %v461 = vadd.f32 %v329, %v460
      %v462 = vpop.f32.mrb[0].mxu0
      %463 = vmatprep.mubr.f32.mxu0 %v243
      %464 = vmatmul.mubr.f32.gmra.mrb[0].mxu0 %v242
      %v465 = vpop.f32.mrb[0].mxu0
      %v466 = vadd.f32 %v329, %v465
      %v467 = vpop.f32.mrb[0].mxu0
      %468 = vmatprep.mubr.f32.mxu0 %v246
      %469 = vmatmul.mubr.f32.gmra.mrb[0].mxu0 %v245
      %v470 = vpop.f32.mrb[0].mxu0
      %v471 = vadd.f32 %v329, %v470
      %v472 = vpop.f32.mrb[0].mxu0
      %473 = vmatprep.mubr.f32.mxu0 %v249
      %474 = vmatmul.mubr.f32.gmra.mrb[0].mxu0 %v248
      %v475 = vpop.f32.mrb[0].mxu0
      %v476 = vadd.f32 %v329, %v475
      %v477 = vpop.f32.mrb[0].mxu0
      %478 = vmatprep.mubr.f32.mxu0 %v252
      %479 = vmatmul.mubr.f32.gmra.mrb[0].mxu0 %v251
      %v480 = vpop.f32.mrb[0].mxu0
      %v481 = vadd.f32 %v329, %v480
      %v482 = vpop.f32.mrb[0].mxu0
      %483 = vmatprep.mubr.f32.mxu0 %v255
      %484 = vmatmul.mubr.f32.gmra.mrb[0].mxu0 %v254
      %v485 = vpop.f32.mrb[0].mxu0
      %v486 = vadd.f32 %v329, %v485
      %v487 = vpop.f32.mrb[0].mxu0
      %488 = vmatprep.mubr.f32.mxu0 %v258
      %489 = vmatmul.mubr.f32.gmra.mrb[0].mxu0 %v257
      %v490 = vpop.f32.mrb[0].mxu0
      %v491 = vadd.f32 %v329, %v490
      %v492 = vpop.f32.mrb[0].mxu0
      %493 = vmatprep.mubr.f32.mxu0 %v261
      %494 = vmatmul.mubr.f32.gmra.mrb[0].mxu0 %v260
      %v495 = vpop.f32.mrb[0].mxu0
      %v496 = vadd.f32 %v329, %v495
      %v497 = vpop.f32.mrb[0].mxu0
      %498 = vmatprep.mubr.f32.mxu0 %v264
      %499 = vmatmul.mubr.f32.gmra.mrb[0].mxu0 %v263
      %v500 = vpop.f32.mrb[0].mxu0
      %v501 = vadd.f32 %v329, %v500
      %v502 = vpop.f32.mrb[0].mxu0
      %503 = vmatprep.mubr.f32.mxu0 %v267
      %504 = vmatmul.mubr.f32.gmra.mrb[0].mxu0 %v266
      %v505 = vpop.f32.mrb[0].mxu0
      %v506 = vadd.f32 %v329, %v505
      %v507 = vpop.f32.mrb[0].mxu0
      %508 = vmatprep.mubr.f32.mxu0 %v270
      %509 = vmatmul.mubr.f32.gmra.mrb[0].mxu0 %v269
      %v510 = vpop.f32.mrb[0].mxu0
      %v511 = vadd.f32 %v329, %v510
      %v512 = vpop.f32.mrb[0].mxu0
      %513 = vmatprep.mubr.f32.mxu0 %v273
      %514 = vmatmul.mubr.f32.gmra.mrb[0].mxu0 %v272
      %v515 = vpop.f32.mrb[0].mxu0
      %v516 = vadd.f32 %v329, %v515
      %v517 = vpop.f32.mrb[0].mxu0
      %518 = vmatprep.mubr.f32.mxu0 %v276
      %519 = vmatmul.mubr.f32.gmra.mrb[0].mxu0 %v275
      %v520 = vpop.f32.mrb[0].mxu0
      %v521 = vadd.f32 %v329, %v520
      %v522 = vpop.f32.mrb[0].mxu0
      %523 = vmatprep.mubr.f32.mxu0 %v279
      %524 = vmatmul.mubr.f32.gmra.mrb[0].mxu0 %v278
      %v525 = vpop.f32.mrb[0].mxu0
      %v526 = vadd.f32 %v329, %v525
      %v527 = vpop.f32.mrb[0].mxu0
      %528 = vdwg.mxu0
      %529 = vmatprep.subr.mxu0 0.0
      %530 = vmatpush1.msra.mxu0 %v313
      %531 = vmatprep.subr.mxu0 0.0
      %532 = vmatpush1.msra.mxu0 %v314
      %533 = vmatprep.subr.mxu0 0.0
      %534 = vmatpush1.msra.mxu0 %v315
      %535 = vmatprep.subr.mxu0 0.0
      %536 = vmatpush1.msra.mxu0 %v316
      %537 = vmatprep.subr.mxu0 0.0
      %538 = vmatpush1.msra.mxu0 %v317
      %539 = vmatprep.subr.mxu0 0.0
      %540 = vmatpush1.msra.mxu0 %v318
      %541 = vmatprep.subr.mxu0 0.0
      %542 = vmatpush1.msra.mxu0 %v319
      %543 = vmatprep.subr.mxu0 0.0
      %544 = vmatpush1.msra.mxu0 %v320
      %545 = vmatprep.subr.mxu0 0.0
      %546 = vmatpush1.msra.mxu0 %v321
      %547 = vmatprep.subr.mxu0 0.0
      %548 = vmatpush1.msra.mxu0 %v322
      %549 = vmatprep.subr.mxu0 0.0
      %550 = vmatpush1.msra.mxu0 %v382
      %551 = vmatprep.subr.mxu0 0.0
      %552 = vmatpush1.msra.mxu0 0.0
      %553 = vmatprep.subr.mxu0 0.0
      %554 = vmatpush1.msra.mxu0 0.0
      %555 = vmatprep.subr.mxu0 0.0
      %556 = vmatpush1.msra.mxu0 0.0
      %557 = vmatprep.subr.mxu0 0.0
      %558 = vmatpush1.msra.mxu0 0.0
      %559 = vmatprep.subr.mxu0 0.0
      %560 = vmatpush1.msra.mxu0 0.0
      %561 = vmatprep.subr.mxu0 0.0
      %562 = vmatpush1.msra.mxu0 0.0
      %563 = vmatprep.subr.mxu0 0.0
      %564 = vmatpush1.msra.mxu0 0.0
      %565 = vmatprep.subr.mxu0 0.0
      %566 = vmatpush1.msra.mxu0 0.0
      %567 = vmatprep.subr.mxu0 0.0
      %568 = vmatpush1.msra.mxu0 0.0
      %569 = vmatprep.subr.mxu0 0.0
      %570 = vmatpush1.msra.mxu0 0.0
      %571 = vmatprep.subr.mxu0 0.0
      %572 = vmatpush1.msra.mxu0 0.0
      %573 = vmatprep.subr.mxu0 0.0
      %574 = vmatpush1.msra.mxu0 0.0
      %575 = vmatprep.subr.mxu0 0.0
      %576 = vmatpush1.msra.mxu0 0.0
      %577 = vmatprep.subr.mxu0 0.0
      %578 = vmatpush1.msra.mxu0 0.0
      %579 = vmatprep.subr.mxu0 0.0
      %580 = vmatpush1.msra.mxu0 0.0
      %581 = vmatprep.subr.mxu0 0.0
      %582 = vmatpush1.msra.mxu0 0.0
      %583 = vmatprep.subr.mxu0 0.0
      %584 = vmatpush1.msra.mxu0 0.0
      %585 = vmatprep.subr.mxu0 0.0
      %586 = vmatpush1.msra.mxu0 0.0
      %587 = vmatprep.subr.mxu0 0.0
      %588 = vmatpush1.msra.mxu0 0.0
      %589 = vmatprep.subr.mxu0 0.0
      %590 = vmatpush1.msra.mxu0 0.0
      %591 = vmatprep.subr.mxu0 0.0
      %592 = vmatpush1.msra.mxu0 0.0
      %593 = vmatprep.mubr.f32.mxu0 0.0
      %594 = vmatmul.mubr.f32.gmra.mrb[0].mxu0 %v333
      %v595 = vpop.f32.mrb[0].mxu0
      %v596 = vadd.f32 %v451, %v595
      %v597 = vpop.f32.mrb[0].mxu0
      %598 = vmatprep.mubr.f32.mxu0 0.0
      %599 = vmatmul.mubr.f32.gmra.mrb[0].mxu0 %v336
      %v600 = vpop.f32.mrb[0].mxu0
      %v601 = vadd.f32 %v456, %v600
      %v602 = vpop.f32.mrb[0].mxu0
      %603 = vmatprep.mubr.f32.mxu0 0.0
      %604 = vmatmul.mubr.f32.gmra.mrb[0].mxu0 %v339
      %v605 = vpop.f32.mrb[0].mxu0
      %v606 = vadd.f32 %v461, %v605
      %v607 = vpop.f32.mrb[0].mxu0
      %608 = vmatprep.mubr.f32.mxu0 0.0
      %609 = vmatmul.mubr.f32.gmra.mrb[0].mxu0 %v342
      %v610 = vpop.f32.mrb[0].mxu0
      %v611 = vadd.f32 %v466, %v610
      %v612 = vpop.f32.mrb[0].mxu0
      %613 = vmatprep.mubr.f32.mxu0 0.0
      %614 = vmatmul.mubr.f32.gmra.mrb[0].mxu0 %v345
      %v615 = vpop.f32.mrb[0].mxu0
      %v616 = vadd.f32 %v471, %v615
      %v617 = vpop.f32.mrb[0].mxu0
      %618 = vmatprep.mubr.f32.mxu0 0.0
      %619 = vmatmul.mubr.f32.gmra.mrb[0].mxu0 %v348
      %v620 = vpop.f32.mrb[0].mxu0
      %v621 = vadd.f32 %v476, %v620
      %v622 = vpop.f32.mrb[0].mxu0
      %623 = vmatprep.mubr.f32.mxu0 0.0
      %624 = vmatmul.mubr.f32.gmra.mrb[0].mxu0 %v351
      %v625 = vpop.f32.mrb[0].mxu0
      %v626 = vadd.f32 %v481, %v625
      %v627 = vpop.f32.mrb[0].mxu0
      %628 = vmatprep.mubr.f32.mxu0 0.0
      %629 = vmatmul.mubr.f32.gmra.mrb[0].mxu0 %v354
      %v630 = vpop.f32.mrb[0].mxu0
      %v631 = vadd.f32 %v486, %v630
      %v632 = vpop.f32.mrb[0].mxu0
      %633 = vmatprep.mubr.f32.mxu0 0.0
      %634 = vmatmul.mubr.f32.gmra.mrb[0].mxu0 %v357
      %v635 = vpop.f32.mrb[0].mxu0
      %v636 = vadd.f32 %v491, %v635
      %v637 = vpop.f32.mrb[0].mxu0
      %638 = vmatprep.mubr.f32.mxu0 0.0
      %639 = vmatmul.mubr.f32.gmra.mrb[0].mxu0 %v360
      %v640 = vpop.f32.mrb[0].mxu0
      %v641 = vadd.f32 %v496, %v640
      %v642 = vpop.f32.mrb[0].mxu0
      %643 = vmatprep.mubr.f32.mxu0 0.0
      %644 = vmatmul.mubr.f32.gmra.mrb[0].mxu0 %v363
      %v645 = vpop.f32.mrb[0].mxu0
      %v646 = vadd.f32 %v501, %v645
      %v647 = vpop.f32.mrb[0].mxu0
      %648 = vmatprep.mubr.f32.mxu0 0.0
      %649 = vmatmul.mubr.f32.gmra.mrb[0].mxu0 %v366
      %v650 = vpop.f32.mrb[0].mxu0
      %v651 = vadd.f32 %v506, %v650
      %v652 = vpop.f32.mrb[0].mxu0
      %653 = vmatprep.mubr.f32.mxu0 0.0
      %654 = vmatmul.mubr.f32.gmra.mrb[0].mxu0 %v369
      %v655 = vpop.f32.mrb[0].mxu0
      %v656 = vadd.f32 %v511, %v655
      %v657 = vpop.f32.mrb[0].mxu0
      %658 = vmatprep.mubr.f32.mxu0 0.0
      %659 = vmatmul.mubr.f32.gmra.mrb[0].mxu0 %v372
      %v660 = vpop.f32.mrb[0].mxu0
      %v661 = vadd.f32 %v516, %v660
      %v662 = vpop.f32.mrb[0].mxu0
      %663 = vmatprep.mubr.f32.mxu0 0.0
      %664 = vmatmul.mubr.f32.gmra.mrb[0].mxu0 %v375
      %v665 = vpop.f32.mrb[0].mxu0
      %v666 = vadd.f32 %v521, %v665
      %v667 = vpop.f32.mrb[0].mxu0
      %668 = vmatprep.mubr.f32.mxu0 0.0
      %669 = vmatmul.mubr.f32.gmra.mrb[0].mxu0 %v378
      %v670 = vpop.f32.mrb[0].mxu0
      %v671 = vadd.f32 %v526, %v670
      %v672 = vpop.f32.mrb[0].mxu0
      %673 = vdwg.mxu0
      %v674 = vmax.f32 %v596, 0.0
      %v675 = vmax.f32 %v601, 0.0
      %v676 = vmax.f32 %v606, 0.0
      %v677 = vmax.f32 %v611, 0.0
      %v678 = vmax.f32 %v616, 0.0
      %v679 = vmax.f32 %v621, 0.0
      %v680 = vmax.f32 %v626, 0.0
      %v681 = vmax.f32 %v631, 0.0
      %v682 = vmax.f32 %v636, 0.0
      %v683 = vmax.f32 %v641, 0.0
      %v684 = vmax.f32 %v646, 0.0
      %v685 = vmax.f32 %v651, 0.0
      %v686 = vmax.f32 %v656, 0.0
      %v687 = vmax.f32 %v661, 0.0
      %v688 = vmax.f32 %v666, 0.0
      %v689 = vmax.f32 %v671, 0.0
      %v690 = vld [vmem:[%s3] sm:$0xff]
      %v691 = vld [vmem:[%s3 + $0x8] sm:$0xff]
      %v692 = vld [vmem:[%s3 + $0x10] sm:$0xff]
      %v693 = vld [vmem:[%s3 + $0x18] sm:$0xff]
      %v694 = vld [vmem:[%s3 + $0x20] sm:$0xff]
      %v695 = vld [vmem:[%s3 + $0x28] sm:$0xff]
      %v696 = vld [vmem:[%s3 + $0x30] sm:$0xff]
      %v697 = vld [vmem:[%s3 + $0x38] sm:$0xff]
      %v698 = vld [vmem:[%s3 + $0x40] sm:$0xff]
      %v699 = vld [vmem:[%s3 + $0x48] sm:$0xff]
      %v700 = vld [vmem:[%s3 + $0x50] sm:$0xff]
      %v701 = vld [vmem:[%s3 + $0x58] sm:$0xff]
      %v702 = vld [vmem:[%s3 + $0x60] sm:$0xff]
      %v703 = vld [vmem:[%s3 + $0x68] sm:$0xff]
      %v704 = vld [vmem:[%s3 + $0x70] sm:$0xff]
      %v705 = vld [vmem:[%s3 + $0x78] sm:$0xff]
      %v706 = vld [vmem:[#allocation2] sm:$0x1]
      %v708 = vlaneseq
      %v709 = vshrl.u32 %v708, 7
      %v710 = vsub.s32 0, %v709
      %v711 = vrot.slane %v706, %v710
      %713 = vmatprep.subr.mxu0 0.0
      %714 = vmatpush1.msra.mxu0 %v690
      %715 = vmatprep.subr.mxu0 0.0
      %716 = vmatpush1.msra.mxu0 %v691
      %717 = vmatprep.subr.mxu0 0.0
      %718 = vmatpush1.msra.mxu0 %v692
      %719 = vmatprep.subr.mxu0 0.0
      %720 = vmatpush1.msra.mxu0 %v693
      %721 = vmatprep.subr.mxu0 0.0
      %722 = vmatpush1.msra.mxu0 %v694
      %723 = vmatprep.subr.mxu0 0.0
      %724 = vmatpush1.msra.mxu0 %v695
      %725 = vmatprep.subr.mxu0 0.0
      %726 = vmatpush1.msra.mxu0 %v696
      %727 = vmatprep.subr.mxu0 0.0
      %728 = vmatpush1.msra.mxu0 %v697
      %729 = vmatprep.subr.mxu0 0.0
      %730 = vmatpush1.msra.mxu0 %v698
      %731 = vmatprep.subr.mxu0 0.0
      %732 = vmatpush1.msra.mxu0 %v699
      %733 = vmatprep.subr.mxu0 0.0
      %734 = vmatpush1.msra.mxu0 %v700
      %735 = vmatprep.subr.mxu0 0.0
      %736 = vmatpush1.msra.mxu0 %v701
      %737 = vmatprep.subr.mxu0 0.0
      %738 = vmatpush1.msra.mxu0 %v702
      %739 = vmatprep.subr.mxu0 0.0
      %740 = vmatpush1.msra.mxu0 %v703
      %741 = vmatprep.subr.mxu0 0.0
      %742 = vmatpush1.msra.mxu0 %v704
      %743 = vmatprep.subr.mxu0 0.0
      %744 = vmatpush1.msra.mxu0 %v705
      %745 = vmatprep.subr.mxu0 0.0
      %746 = vmatpush1.msra.mxu0 0.0
      %747 = vmatprep.subr.mxu0 0.0
      %748 = vmatpush1.msra.mxu0 0.0
      %749 = vmatprep.subr.mxu0 0.0
      %750 = vmatpush1.msra.mxu0 0.0
      %751 = vmatprep.subr.mxu0 0.0
      %752 = vmatpush1.msra.mxu0 0.0
      %753 = vmatprep.subr.mxu0 0.0
      %754 = vmatpush1.msra.mxu0 0.0
      %755 = vmatprep.subr.mxu0 0.0
      %756 = vmatpush1.msra.mxu0 0.0
      %757 = vmatprep.subr.mxu0 0.0
      %758 = vmatpush1.msra.mxu0 0.0
      %759 = vmatprep.subr.mxu0 0.0
      %760 = vmatpush1.msra.mxu0 0.0
      %761 = vmatprep.subr.mxu0 0.0
      %762 = vmatpush1.msra.mxu0 0.0
      %763 = vmatprep.subr.mxu0 0.0
      %764 = vmatpush1.msra.mxu0 0.0
      %765 = vmatprep.subr.mxu0 0.0
      %766 = vmatpush1.msra.mxu0 0.0
      %767 = vmatprep.subr.mxu0 0.0
      %768 = vmatpush1.msra.mxu0 0.0
      %769 = vmatprep.subr.mxu0 0.0
      %770 = vmatpush1.msra.mxu0 0.0
      %771 = vmatprep.subr.mxu0 0.0
      %772 = vmatpush1.msra.mxu0 0.0
      %773 = vmatprep.subr.mxu0 0.0
      %774 = vmatpush1.msra.mxu0 0.0
      %775 = vmatprep.subr.mxu0 0.0
      %776 = vmatpush1.msra.mxu0 0.0
      %777 = vmatprep.mubr.f32.mxu0 0.0
      %778 = vmatmul.mubr.f32.gmra.mrb[0].mxu0 %v674
      %v779 = vpop.f32.mrb[0].mxu0
      %v780 = vadd.f32 %v711, %v779
      %v781 = vpop.f32.mrb[0].mxu0
      %782 = vmatprep.mubr.f32.mxu0 0.0
      %783 = vmatmul.mubr.f32.gmra.mrb[0].mxu0 %v675
      %v784 = vpop.f32.mrb[0].mxu0
      %v785 = vadd.f32 %v711, %v784
      %v786 = vpop.f32.mrb[0].mxu0
      %787 = vmatprep.mubr.f32.mxu0 0.0
      %788 = vmatmul.mubr.f32.gmra.mrb[0].mxu0 %v676
      %v789 = vpop.f32.mrb[0].mxu0
      %v790 = vadd.f32 %v711, %v789
      %v791 = vpop.f32.mrb[0].mxu0
      %792 = vmatprep.mubr.f32.mxu0 0.0
      %793 = vmatmul.mubr.f32.gmra.mrb[0].mxu0 %v677
      %v794 = vpop.f32.mrb[0].mxu0
      %v795 = vadd.f32 %v711, %v794
      %v796 = vpop.f32.mrb[0].mxu0
      %797 = vmatprep.mubr.f32.mxu0 0.0
      %798 = vmatmul.mubr.f32.gmra.mrb[0].mxu0 %v678
      %v799 = vpop.f32.mrb[0].mxu0
      %v800 = vadd.f32 %v711, %v799
      %v801 = vpop.f32.mrb[0].mxu0
      %802 = vmatprep.mubr.f32.mxu0 0.0
      %803 = vmatmul.mubr.f32.gmra.mrb[0].mxu0 %v679
      %v804 = vpop.f32.mrb[0].mxu0
      %v805 = vadd.f32 %v711, %v804
      %v806 = vpop.f32.mrb[0].mxu0
      %807 = vmatprep.mubr.f32.mxu0 0.0
      %808 = vmatmul.mubr.f32.gmra.mrb[0].mxu0 %v680
      %v809 = vpop.f32.mrb[0].mxu0
      %v810 = vadd.f32 %v711, %v809
      %v811 = vpop.f32.mrb[0].mxu0
      %812 = vmatprep.mubr.f32.mxu0 0.0
      %813 = vmatmul.mubr.f32.gmra.mrb[0].mxu0 %v681
      %v814 = vpop.f32.mrb[0].mxu0
      %v815 = vadd.f32 %v711, %v814
      %v816 = vpop.f32.mrb[0].mxu0
      %817 = vmatprep.mubr.f32.mxu0 0.0
      %818 = vmatmul.mubr.f32.gmra.mrb[0].mxu0 %v682
      %v819 = vpop.f32.mrb[0].mxu0
      %v820 = vadd.f32 %v711, %v819
      %v821 = vpop.f32.mrb[0].mxu0
      %822 = vmatprep.mubr.f32.mxu0 0.0
      %823 = vmatmul.mubr.f32.gmra.mrb[0].mxu0 %v683
      %v824 = vpop.f32.mrb[0].mxu0
      %v825 = vadd.f32 %v711, %v824
      %v826 = vpop.f32.mrb[0].mxu0
      %827 = vmatprep.mubr.f32.mxu0 0.0
      %828 = vmatmul.mubr.f32.gmra.mrb[0].mxu0 %v684
      %v829 = vpop.f32.mrb[0].mxu0
      %v830 = vadd.f32 %v711, %v829
      %v831 = vpop.f32.mrb[0].mxu0
      %832 = vmatprep.mubr.f32.mxu0 0.0
      %833 = vmatmul.mubr.f32.gmra.mrb[0].mxu0 %v685
      %v834 = vpop.f32.mrb[0].mxu0
      %v835 = vadd.f32 %v711, %v834
      %v836 = vpop.f32.mrb[0].mxu0
      %837 = vmatprep.mubr.f32.mxu0 0.0
      %838 = vmatmul.mubr.f32.gmra.mrb[0].mxu0 %v686
      %v839 = vpop.f32.mrb[0].mxu0
      %v840 = vadd.f32 %v711, %v839
      %v841 = vpop.f32.mrb[0].mxu0
      %842 = vmatprep.mubr.f32.mxu0 0.0
      %843 = vmatmul.mubr.f32.gmra.mrb[0].mxu0 %v687
      %v844 = vpop.f32.mrb[0].mxu0
      %v845 = vadd.f32 %v711, %v844
      %v846 = vpop.f32.mrb[0].mxu0
      %847 = vmatprep.mubr.f32.mxu0 0.0
      %848 = vmatmul.mubr.f32.gmra.mrb[0].mxu0 %v688
      %v849 = vpop.f32.mrb[0].mxu0
      %v850 = vadd.f32 %v711, %v849
      %v851 = vpop.f32.mrb[0].mxu0
      %852 = vmatprep.mubr.f32.mxu0 0.0
      %853 = vmatmul.mubr.f32.gmra.mrb[0].mxu0 %v689
      %v854 = vpop.f32.mrb[0].mxu0
      %v855 = vadd.f32 %v711, %v854
      %v856 = vpop.f32.mrb[0].mxu0
      %857 = vdwg.mxu0
      %v858 = vsub.f32 0.0, %v780
      %v859 = vsub.f32 0.0, %v785
      %v860 = vsub.f32 0.0, %v790
      %v861 = vsub.f32 0.0, %v795
      %v862 = vsub.f32 0.0, %v800
      %v863 = vsub.f32 0.0, %v805
      %v864 = vsub.f32 0.0, %v810
      %v865 = vsub.f32 0.0, %v815
      %v866 = vsub.f32 0.0, %v820
      %v867 = vsub.f32 0.0, %v825
      %v868 = vsub.f32 0.0, %v830
      %v869 = vsub.f32 0.0, %v835
      %v870 = vsub.f32 0.0, %v840
      %v871 = vsub.f32 0.0, %v845
      %v872 = vsub.f32 0.0, %v850
      %v873 = vsub.f32 0.0, %v855
      %v874 = vmul.f32 %v858, 1.442695
      %v875 = vpow.pop %v874
      %v876 = vmul.f32 %v859, 1.442695
      %v877 = vpow.pop %v876
      %v878 = vmul.f32 %v860, 1.442695
      %v879 = vpow.pop %v878
      %v880 = vmul.f32 %v861, 1.442695
      %v881 = vpow.pop %v880
      %v882 = vmul.f32 %v862, 1.442695
      %v883 = vpow.pop %v882
      %v884 = vmul.f32 %v863, 1.442695
      %v885 = vpow.pop %v884
      %v886 = vmul.f32 %v864, 1.442695
      %v887 = vpow.pop %v886
      %v888 = vmul.f32 %v865, 1.442695
      %v889 = vpow.pop %v888
      %v890 = vmul.f32 %v866, 1.442695
      %v891 = vpow.pop %v890
      %v892 = vmul.f32 %v867, 1.442695
      %v893 = vpow.pop %v892
      %v894 = vmul.f32 %v868, 1.442695
      %v895 = vpow.pop %v894
      %v896 = vmul.f32 %v869, 1.442695
      %v897 = vpow.pop %v896
      %v898 = vmul.f32 %v870, 1.442695
      %v899 = vpow.pop %v898
      %v900 = vmul.f32 %v871, 1.442695
      %v901 = vpow.pop %v900
      %v902 = vmul.f32 %v872, 1.442695
      %v903 = vpow.pop %v902
      %v904 = vmul.f32 %v873, 1.442695
      %v905 = vpow.pop %v904
      %v906 = vadd.f32 %v875, 1.0
      %v907 = vadd.f32 %v877, 1.0
      %v908 = vadd.f32 %v879, 1.0
      %v909 = vadd.f32 %v881, 1.0
      %v910 = vadd.f32 %v883, 1.0
      %v911 = vadd.f32 %v885, 1.0
      %v912 = vadd.f32 %v887, 1.0
      %v913 = vadd.f32 %v889, 1.0
      %v914 = vadd.f32 %v891, 1.0
      %v915 = vadd.f32 %v893, 1.0
      %v916 = vadd.f32 %v895, 1.0
      %v917 = vadd.f32 %v897, 1.0
      %v918 = vadd.f32 %v899, 1.0
      %v919 = vadd.f32 %v901, 1.0
      %v920 = vadd.f32 %v903, 1.0
      %v921 = vadd.f32 %v905, 1.0
      %v922 = vrcp.pop %v906
      %v923 = vrcp.pop %v907
      %v924 = vrcp.pop %v908
      %v925 = vrcp.pop %v909
      %v926 = vrcp.pop %v910
      %v927 = vrcp.pop %v911
      %v928 = vrcp.pop %v912
      %v929 = vrcp.pop %v913
      %v930 = vrcp.pop %v914
      %v931 = vrcp.pop %v915
      %v932 = vrcp.pop %v916
      %v933 = vrcp.pop %v917
      %v934 = vrcp.pop %v918
      %v935 = vrcp.pop %v919
      %v936 = vrcp.pop %v920
      %v937 = vrcp.pop %v921
      %vm938 = vcmask 7168
      %939 = vst.msk [vmem:[%s231] sm:$0xff] %vm938, %v922
      %940 = vst.msk [vmem:[%s231 + $0x8] sm:$0xff] %vm938, %v923
      %941 = vst.msk [vmem:[%s231 + $0x10] sm:$0xff] %vm938, %v924
      %942 = vst.msk [vmem:[%s231 + $0x18] sm:$0xff] %vm938, %v925
      %943 = vst.msk [vmem:[%s231 + $0x20] sm:$0xff] %vm938, %v926
      %944 = vst.msk [vmem:[%s231 + $0x28] sm:$0xff] %vm938, %v927
      %945 = vst.msk [vmem:[%s231 + $0x30] sm:$0xff] %vm938, %v928
      %946 = vst.msk [vmem:[%s231 + $0x38] sm:$0xff] %vm938, %v929
      %947 = vst.msk [vmem:[%s231 + $0x40] sm:$0xff] %vm938, %v930
      %948 = vst.msk [vmem:[%s231 + $0x48] sm:$0xff] %vm938, %v931
      %949 = vst.msk [vmem:[%s231 + $0x50] sm:$0xff] %vm938, %v932
      %950 = vst.msk [vmem:[%s231 + $0x58] sm:$0xff] %vm938, %v933
      %951 = vst.msk [vmem:[%s231 + $0x60] sm:$0xff] %vm938, %v934
      %952 = vst.msk [vmem:[%s231 + $0x68] sm:$0xff] %vm938, %v935
      %953 = vst.msk [vmem:[%s231 + $0x70] sm:$0xff] %vm938, %v936
      %954 = vst.msk [vmem:[%s231 + $0x78] sm:$0xff] %vm938, %v937
      %s955 = smul.u32 16, %s18
      %p956 = scmp.lt.s32.totalorder %s955, 63
      %s957 = scalar_select %p956, %s955, 63
      %s958 = smul.addr %s957, 8
      %s959 = scalar_lea.vmem %s5, %s958
      // Predicated region
      $region41: #{tpu_custom_call.1} parent=39 // pred_check
        %p960 = pneg %p146
      $region42: #{tpu_custom_call.1} parent=39 // pred_check_branch
        %962 = sbr.rel (%p960) target = $region44
      $region43: #{tpu_custom_call.1} parent=39 // pred_region
        %s963 = smul.u32 16, %s18
      $region44: #{tpu_custom_call.1} parent=39 // pred_fallthru
        _
    $region40: #{tpu_custom_call.1} parent=5 // pred_fallthru
      _
    %p964 = scmp.le.s32.totalorder 2, %s13
    // Predicated region
    $region45: #{tpu_custom_call.1} parent=5 // pred_check
      %p965 = pneg %p964
    $region46: #{tpu_custom_call.1} parent=5 // pred_check_branch
      %967 = sbr.rel (%p965) target = $region48
    $region47: #{tpu_custom_call.1} parent=5 // pred_region
      %s968 = ssub.s32 %s13, 2
      // Predicated region
      $region49: #{tpu_custom_call.1} parent=47 // pred_check
        %p969 = pneg %p152
      $region50: #{tpu_custom_call.1} parent=47 // pred_check_branch
        %971 = sbr.rel (%p969) target = $region52
      $region51: #{tpu_custom_call.1} parent=47 // pred_region
        %s972 = smul.u32 16, %s19
        %p973 = scmp.lt.s32.totalorder %s972, 63
        %s974 = scalar_select %p973, %s972, 63
        %s975 = smul.addr %s974, 8
        %s976 = scalar_lea.vmem %s5, %s975
      $region52: #{tpu_custom_call.1} parent=47 // pred_fallthru
        _
    $region48: #{tpu_custom_call.1} parent=5 // pred_fallthru
      _
  $region6: #{tpu_custom_call.1} parent=0 // loop_footer
    %s17 = sadd.s32 1, %s13
  $region7: #{tpu_custom_call.1} parent=0 // loop_footer_branch
    %12 = sbr.rel target = $region3
  $region8: #{tpu_custom_call.1} parent=0 // loop_exit
    _

</llo_original>
